<compile_context>
chip_gen: v7x
topology: tpu7x:2x2x1
jax: 0.10.0
libtpu: 0.0.40
codegen_flags: <defaults>
</compile_context>

<pallas_src>
import numpy as np
import jax
import jax.numpy as jnp
from jax import lax
from jax.experimental import pallas as pl
from jax.experimental.pallas import tpu as pltpu


def _round_up(a, m):
    return (a + m - 1) // m * m


# ---------------------------------------------------------------------------
# Kernel 1: shared filtration MLP, computed transposed (nodes on the lane axis).
#   filtered_v_t = W2^T @ relu(W1^T @ x^T + b1) + b2        -> [F, N]  (lane-dense)
# bf16 MXU operands, f32 accumulation + f32 bias/relu.
# ---------------------------------------------------------------------------
def _filtration_mlp_kernel(xt_ref, w1t_ref, b1_ref, w2t_ref, b2_ref, ot_ref):
    xb = xt_ref[...].astype(jnp.bfloat16)
    w1b = w1t_ref[...].astype(jnp.bfloat16)
    h = jnp.dot(w1b, xb, preferred_element_type=jnp.float32) + b1_ref[...]
    h = jnp.maximum(h, 0.0)
    w2b = w2t_ref[...].astype(jnp.bfloat16)
    ot_ref[...] = (jnp.dot(w2b, h.astype(jnp.bfloat16),
                           preferred_element_type=jnp.float32) + b2_ref[...])


def filtration_mlp_t(x, w1, b1, w2, b2, *, max_tile_n=512):
    n, c = x.shape
    hdim = w1.shape[1]
    f = w2.shape[1]
    assert max_tile_n % 128 == 0
    tile_n = min(max_tile_n, _round_up(n, 128))      # single grid step at toy sizes
    n_pad = _round_up(n, tile_n)
    xt = jnp.zeros((c, n_pad), jnp.float32).at[:, :n].set(x.T)
    return pl.pallas_call(
        _filtration_mlp_kernel,
        out_shape=jax.ShapeDtypeStruct((f, n_pad), jnp.float32),
        grid=(n_pad // tile_n,),
        in_specs=[
            pl.BlockSpec((c, tile_n), lambda i: (0, i)),
            pl.BlockSpec((hdim, c), lambda i: (0, 0)),
            pl.BlockSpec((hdim, 1), lambda i: (0, 0)),
            pl.BlockSpec((f, hdim), lambda i: (0, 0)),
            pl.BlockSpec((f, 1), lambda i: (0, 0)),
        ],
        out_specs=pl.BlockSpec((f, tile_n), lambda i: (0, i)),
        compiler_params=pltpu.CompilerParams(dimension_semantics=("parallel",)),
    )(xt, w1.T, b1.reshape(-1, 1), w2.T, b2.reshape(-1, 1))


# ---------------------------------------------------------------------------
# Kernel 2: edge filtration as a vectorized one-hot MXU gather.
#   filtered_e_t[:, e] = max(filtered_v_t[:, src[e]], filtered_v_t[:, dst[e]])
# For each tile of edges, build one-hot [N_pad, tile_E] matrices (exact 0/1 in bf16) and
# gather with two MXU dots.  Output is [F, tile_E]: lane-dense, fully unmasked stores.
# TODO(synk): for very large vertex counts the [N_pad, tile_E] one-hot / resident
# filtered_v would exceed VMEM; a production version would gather hierarchically.
# ---------------------------------------------------------------------------
def _edge_gather_max_kernel(ei_ref, fvt_ref, fet_ref):
    n_pad = fvt_ref.shape[1]
    tile_e = fet_ref.shape[1]
    idx = ei_ref[...]                                   # [2, tile_E] int32
    src = idx[0:1, :]
    dst = idx[1:2, :]
    vid = lax.broadcasted_iota(jnp.int32, (n_pad, tile_e), 0)
    oh_src = jnp.where(vid == src, 1.0, 0.0).astype(jnp.bfloat16)   # exact 0/1
    oh_dst = jnp.where(vid == dst, 1.0, 0.0).astype(jnp.bfloat16)
    fvb = fvt_ref[...].astype(jnp.bfloat16)
    g_src = jnp.dot(fvb, oh_src, preferred_element_type=jnp.float32)
    g_dst = jnp.dot(fvb, oh_dst, preferred_element_type=jnp.float32)
    fet_ref[...] = jnp.maximum(g_src, g_dst)


def edge_gather_max_t(edge_index, filtered_v_t, *, max_tile_e=256):
    f, n_pad = filtered_v_t.shape
    e = edge_index.shape[1]
    assert max_tile_e % 128 == 0
    tile_e = min(max_tile_e, _round_up(e, 128))
    e_pad = _round_up(e, tile_e)
    ei = jnp.zeros((2, e_pad), jnp.int32).at[:, :e].set(edge_index)
    return pl.pallas_call(
        _edge_gather_max_kernel,
        out_shape=jax.ShapeDtypeStruct((f, e_pad), jnp.float32),
        grid=(e_pad // tile_e,),
        in_specs=[
            pl.BlockSpec((2, tile_e), lambda i: (0, i)),
            pl.BlockSpec((f, n_pad), lambda i: (0, 0)),
        ],
        out_specs=pl.BlockSpec((f, tile_e), lambda i: (0, i)),
        compiler_params=pltpu.CompilerParams(dimension_semantics=("parallel",)),
    )(ei, filtered_v_t)


# ---------------------------------------------------------------------------
# Kernel 3 (fused): dim-1 coordinate functions + persistence mask + collapse_dim1.
#   Triangle: relu(death - |birth - t_k|)     Line: w0_k*birth + w1_k*death + b_k
# Coord activations are produced lane-dense as [F*d1, E_pad] (edges on lanes).
# Per-graph masked mean / variance are computed with a single segment one-hot matmul:
#   seg [G, E] = (edge in graph g) * (persistence-1 mask), sums = seg @ acts (MXU, bf16),
#   sqsums = seg @ acts^2, mean = sums/cnt, var = E[x^2]-E[x]^2 (matches the torch module).
# Counts are clamped to >=1 so an all-masked graph yields zeros instead of NaN.
# TODO(synk): at production edge counts this would be gridded over edge tiles with
# partial segment sums accumulated across the grid; a single tile suffices here.
# ---------------------------------------------------------------------------
def _coord_collapse_kernel(slices_ref, birth_ref, death_ref, t_ref, w0_ref, w1_ref,
                           bl_ref, acts_ref, ga_ref):
    f_filt, e_pad = birth_ref.shape
    n_graphs = ga_ref.shape[0]

    B = birth_ref[...]                       # [F, E]
    D = death_ref[...]                       # [F, E]
    t = t_ref[...]                           # [n_tri, 1]
    w0 = w0_ref[...]                         # [n_lin, 1]
    w1 = w1_ref[...]
    bl = bl_ref[...]

    rows = []
    for f in range(f_filt):                  # static; each iteration vectorized over lanes
        b = B[f:f + 1, :]                    # [1, E]
        d = D[f:f + 1, :]
        tri = jnp.maximum(d - jnp.abs(t - b), 0.0)     # [n_tri, E]
        lin = w0 * b + w1 * d + bl                     # [n_lin, E]
        rows.append(tri)
        rows.append(lin)
    acts = jnp.concatenate(rows, axis=0)               # [F*d1, E]  lane-dense
    acts_ref[...] = acts

    # persistence1 mask: (persistences1 != 0).any(2).any(0)
    nz = jnp.logical_or(B != 0.0, D != 0.0)
    mask = jnp.max(jnp.where(nz, 1.0, 0.0), axis=0, keepdims=True)     # [1, E]

    # masked segment one-hot built from SMEM slice boundaries
    eidx = lax.broadcasted_iota(jnp.int32, (1, e_pad), 1)
    seg_rows = []
    for g in range(n_graphs):                # static
        in_g = jnp.logical_and(eidx >= slices_ref[g], eidx < slices_ref[g + 1])
        seg_rows.append(jnp.where(in_g, mask, 0.0))
    seg = jnp.concatenate(seg_rows, axis=0)            # [G, E]

    cnt = jnp.sum(seg, axis=1, keepdims=True)          # [G, 1]
    # exact reciprocal (approx=True would perturb the E[x^2]-E[x]^2 cancellation)
    inv = pl.reciprocal(jnp.maximum(cnt, 1.0), approx=False)

    dn = (((1,), (1,)), ((), ()))
    seg_b = seg.astype(jnp.bfloat16)
    acts_b = acts.astype(jnp.bfloat16)
    sq_b = (acts * acts).astype(jnp.bfloat16)
    sums = lax.dot_general(seg_b, acts_b, dn, preferred_element_type=jnp.float32)  # [G, Dt]
    sqs = lax.dot_general(seg_b, sq_b, dn, preferred_element_type=jnp.float32)     # [G, Dt]
    mean = sums * inv
    msq = sqs * inv
    var = msq - mean * mean
    ga_ref[...] = jnp.concatenate([mean, var], axis=1)


def coord_collapse_dim1(pers1, edge_slices, t_tri, w_line, b_line):
    f, e, _ = pers1.shape
    g = edge_slices.shape[0] - 1
    n_tri = t_tri.shape[0]
    n_lin = w_line.shape[1]
    d_total = f * (n_tri + n_lin)
    e_pad = _round_up(e, 128)
    p = jnp.zeros((f, e_pad, 2), jnp.float32).at[:, :e, :].set(pers1)
    birth = p[..., 0]
    death = p[..., 1]
    vmem = pl.BlockSpec(memory_space=pltpu.MemorySpace.VMEM)
    smem = pl.BlockSpec(memory_space=pltpu.MemorySpace.SMEM)
    acts_t, graph_acts = pl.pallas_call(
        _coord_collapse_kernel,
        out_shape=(jax.ShapeDtypeStruct((d_total, e_pad), jnp.float32),
                   jax.ShapeDtypeStruct((g, 2 * d_total), jnp.float32)),
        in_specs=[smem, vmem, vmem, vmem, vmem, vmem, vmem],
        out_specs=(vmem, vmem),
    )(edge_slices, birth, death,
      t_tri.reshape(-1, 1), w_line[0].reshape(-1, 1), w_line[1].reshape(-1, 1),
      b_line.reshape(-1, 1))
    return acts_t, graph_acts


# ---------------------------------------------------------------------------
# Forward wrapper (glue in plain JAX, hot paths in Pallas).
# filtered_v / filtered_e are returned transposed ([F, N] / [F, E]) -- the layout the
# external persistence-homology call consumes -- and coord acts as [F*d1, E].
# ---------------------------------------------------------------------------
def topology_layer_forward(x, edge_index, edge_slices, params, pers0, pers1):
    n = x.shape[0]
    e = edge_index.shape[1]
    fv_t = filtration_mlp_t(x, params["w1"], params["b1"], params["w2"], params["b2"])
    fe_t = edge_gather_max_t(edge_index, fv_t)
    # TODO(synk): persistence homology (external C++ union-find) skipped; pers0/pers1 given.
    acts_t, graph_acts1 = coord_collapse_dim1(
        pers1, edge_slices, params["t_tri"], params["w_line"], params["b_line"])
    return ((pers0, pers1), graph_acts1), fv_t[:, :n], fe_t[:, :e], acts_t[:, :e]


if __name__ == "__main__":
    key = jax.random.PRNGKey(0)

    # module hyper-parameters (small, consistent with __init__)
    features_in = 32
    filtration_hidden = 16
    num_filtrations = 8
    n_tri, n_lin = 3, 3                 # num_coord_funs1 = {"Triangle": 3, "Line": 3}

    # graph batch: 3 graphs
    vertex_slices = np.array([0, 20, 44, 64], dtype=np.int32)
    edge_slices_np = np.array([0, 30, 64, 96], dtype=np.int32)
    n_vertices = int(vertex_slices[-1])
    n_edges = int(edge_slices_np[-1])
    n_graphs = len(vertex_slices) - 1

    keys = jax.random.split(key, 12)
    x = jax.random.normal(keys[0], (n_vertices, features_in), jnp.float32)

    # edges restricted to each graph's vertex range
    ei_parts = []
    for g in range(n_graphs):
        eg = int(edge_slices_np[g + 1] - edge_slices_np[g])
        ei_parts.append(
            jax.random.randint(keys[1 + g], (2, eg), int(vertex_slices[g]),
                               int(vertex_slices[g + 1]), dtype=jnp.int32))
    edge_index = jnp.concatenate(ei_parts, axis=1)

    params = {
        "w1": 0.2 * jax.random.normal(keys[4], (features_in, filtration_hidden), jnp.float32),
        "b1": 0.1 * jax.random.normal(keys[5], (filtration_hidden,), jnp.float32),
        "w2": 0.2 * jax.random.normal(keys[6], (filtration_hidden, num_filtrations), jnp.float32),
        "b2": 0.1 * jax.random.normal(keys[7], (num_filtrations,), jnp.float32),
        "t_tri": jax.random.normal(keys[8], (n_tri,), jnp.float32),
        "w_line": jax.random.normal(keys[9], (2, n_lin), jnp.float32),
        "b_line": 0.1 * jax.random.normal(keys[10], (n_lin,), jnp.float32),
    }

    # TODO(synk): synthetic persistence pairs stand in for the external persistence call.
    pers0 = jax.random.uniform(keys[11], (num_filtrations, n_vertices, 2), jnp.float32)
    pers1 = jax.random.uniform(jax.random.PRNGKey(42), (num_filtrations, n_edges, 2), jnp.float32)
    kill = (jnp.arange(n_edges) % 5 == 0)
    pers1 = jnp.where(kill[None, :, None], 0.0, pers1)

    edge_slices = jnp.asarray(edge_slices_np)

    (outputs, graph_acts1), fv_t, fe_t, acts_t = topology_layer_forward(
        x, edge_index, edge_slices, params, pers0, pers1)
    jax.block_until_ready((fv_t, fe_t, acts_t, graph_acts1))

    # ---------------- numpy reference for validation ----------------
    def _bf16r(a):
        return np.asarray(jnp.asarray(a, jnp.float32).astype(jnp.bfloat16).astype(jnp.float32))

    # 1) filtration MLP (bf16 operands, f32 accumulation -- mirrors the kernel)
    xb, w1b, w2b = _bf16r(x), _bf16r(params["w1"]), _bf16r(params["w2"])
    h_ref = np.maximum(xb @ w1b + np.asarray(params["b1"]), 0.0)
    fv_ref = _bf16r(h_ref) @ w2b + np.asarray(params["b2"])          # [N, F]
    assert np.allclose(np.asarray(fv_t), fv_ref.T, atol=2e-3, rtol=2e-3)

    # 2) edge filtration (one-hot gather selects bf16-rounded filtered_v exactly)
    fvk_b = _bf16r(np.asarray(fv_t))
    src_np, dst_np = np.asarray(edge_index)[0], np.asarray(edge_index)[1]
    fe_ref_t = np.maximum(fvk_b[:, src_np], fvk_b[:, dst_np])
    assert np.allclose(np.asarray(fe_t), fe_ref_t, atol=2e-3, rtol=2e-3)

    # 3) dim-1 coordinate functions (pure f32)
    p1 = np.asarray(pers1)
    t_np = np.asarray(params["t_tri"])
    wl = np.asarray(params["w_line"])
    blin = np.asarray(params["b_line"])
    acts_list = []
    for fidx in range(num_filtrations):
        birth = p1[fidx, :, 0:1]
        death = p1[fidx, :, 1:2]
        tri = np.maximum(death - np.abs(birth - t_np[None, :]), 0.0)
        lin = p1[fidx] @ wl + blin
        acts_list.append(np.concatenate([tri, lin], axis=1))
    ca_ref = np.concatenate(acts_list, axis=1)                        # [E, F*d1]
    acts_k = np.asarray(acts_t)                                       # [F*d1, E]
    assert np.allclose(acts_k.T, ca_ref, atol=2e-3, rtol=2e-3)

    # 4) collapse_dim1 (tight check mirroring the kernel's bf16 segment matmul)
    mask_ref = (p1 != 0).any(axis=2).any(axis=0)
    seg_ref = np.zeros((n_graphs, n_edges), np.float32)
    for g in range(n_graphs):
        s, epos = int(edge_slices_np[g]), int(edge_slices_np[g + 1])
        seg_ref[g, s:epos] = mask_ref[s:epos]
    cnt = seg_ref.sum(axis=1, keepdims=True)
    inv = 1.0 / np.maximum(cnt, 1.0)
    acts_b = _bf16r(acts_k.T)
    sq_b = _bf16r(acts_k.T ** 2)
    mean_t = (seg_ref @ acts_b) * inv
    msq_t = (seg_ref @ sq_b) * inv
    ga_tight = np.concatenate([mean_t, msq_t - mean_t * mean_t], axis=1)
    assert np.allclose(np.asarray(graph_acts1), ga_tight, atol=2e-3, rtol=2e-3)

    # coarse sanity check against the full-f32 torch-style reference (bf16 rounding slack)
    rows = []
    for g in range(n_graphs):
        s, epos = int(edge_slices_np[g]), int(edge_slices_np[g + 1])
        sel = ca_ref[s:epos][mask_ref[s:epos]]
        mean = sel.mean(axis=0)
        var = (sel * sel).mean(axis=0) - mean * mean
        rows.append(np.concatenate([mean, var], axis=0))
    ga_ref = np.stack(rows)
    assert np.allclose(np.asarray(graph_acts1), ga_ref, atol=1e-1, rtol=1e-1)

    print("KERNEL_OK")
</pallas_src>

<mosaic_0001>
module attributes {stable_mosaic.version = 11 : i64} {
  func.func @_filtration_mlp_kernel(%arg0: i32, %arg1: memref<32x128xf32, #tpu.memory_space<vmem>>, %arg2: memref<16x32xf32, #tpu.memory_space<vmem>>, %arg3: memref<16x1xf32, #tpu.memory_space<vmem>>, %arg4: memref<8x16xf32, #tpu.memory_space<vmem>>, %arg5: memref<8x1xf32, #tpu.memory_space<vmem>>, %arg6: memref<8x128xf32, #tpu.memory_space<vmem>>) attributes {dimension_semantics = [#tpu.dimension_semantics<parallel>], iteration_bounds = array<i64: 1>, scalar_prefetch = 0 : i64, scratch_operands = 0 : i64, tpu.core_type = #tpu.core_type<tc>, window_params = [{transform_indices = @transform_0, window_bounds = array<i64: 32, 128>}, {pipeline_mode = #tpu.pipeline_mode<synchronous>, transform_indices = @transform_1, window_bounds = array<i64: 16, 32>}, {pipeline_mode = #tpu.pipeline_mode<synchronous>, transform_indices = @transform_2, window_bounds = array<i64: 16, 1>}, {pipeline_mode = #tpu.pipeline_mode<synchronous>, transform_indices = @transform_3, window_bounds = array<i64: 8, 16>}, {pipeline_mode = #tpu.pipeline_mode<synchronous>, transform_indices = @transform_4, window_bounds = array<i64: 8, 1>}, {transform_indices = @transform_5, window_bounds = array<i64: 8, 128>}]} {
    %c0 = arith.constant 0 : index
    %c0_0 = arith.constant 0 : index
    %0 = vector.load %arg1[%c0, %c0_0] : memref<32x128xf32, #tpu.memory_space<vmem>>, vector<32x128xf32>
    %1 = arith.truncf %0 : vector<32x128xf32> to vector<32x128xbf16>
    %c0_1 = arith.constant 0 : index
    %c0_2 = arith.constant 0 : index
    %2 = vector.load %arg2[%c0_1, %c0_2] : memref<16x32xf32, #tpu.memory_space<vmem>>, vector<16x32xf32>
    %3 = arith.truncf %2 : vector<16x32xf32> to vector<16x32xbf16>
    %cst = arith.constant dense<0.000000e+00> : vector<16x128xf32>
    %4 = tpu.matmul %3, %1, %cst {dimension_numbers = #tpu.dot_dimension_numbers<[1], [0], [0], [1], [0, 0, 1, 1], [], []>} : vector<16x32xbf16>, vector<32x128xbf16>, vector<16x128xf32> -> vector<16x128xf32>
    %c0_3 = arith.constant 0 : index
    %c0_4 = arith.constant 0 : index
    %5 = vector.load %arg3[%c0_3, %c0_4] : memref<16x1xf32, #tpu.memory_space<vmem>>, vector<16x1xf32>
    %6 = vector.broadcast %5 : vector<16x1xf32> to vector<16x128xf32>
    %7 = arith.addf %4, %6 : vector<16x128xf32>
    %cst_5 = arith.constant 0.000000e+00 : f32
    %8 = vector.broadcast %cst_5 : f32 to vector<16x128xf32>
    %9 = arith.maximumf %7, %8 : vector<16x128xf32>
    %c0_6 = arith.constant 0 : index
    %c0_7 = arith.constant 0 : index
    %10 = vector.load %arg4[%c0_6, %c0_7] : memref<8x16xf32, #tpu.memory_space<vmem>>, vector<8x16xf32>
    %11 = arith.truncf %10 : vector<8x16xf32> to vector<8x16xbf16>
    %12 = arith.truncf %9 : vector<16x128xf32> to vector<16x128xbf16>
    %cst_8 = arith.constant dense<0.000000e+00> : vector<8x128xf32>
    %13 = tpu.matmul %11, %12, %cst_8 {dimension_numbers = #tpu.dot_dimension_numbers<[1], [0], [0], [1], [0, 0, 1, 1], [], []>} : vector<8x16xbf16>, vector<16x128xbf16>, vector<8x128xf32> -> vector<8x128xf32>
    %c0_9 = arith.constant 0 : index
    %c0_10 = arith.constant 0 : index
    %14 = vector.load %arg5[%c0_9, %c0_10] : memref<8x1xf32, #tpu.memory_space<vmem>>, vector<8x1xf32>
    %15 = vector.broadcast %14 : vector<8x1xf32> to vector<8x128xf32>
    %16 = arith.addf %13, %15 : vector<8x128xf32>
    %c0_11 = arith.constant 0 : index
    %c0_12 = arith.constant 0 : index
    %17 = vector.load %arg6[%c0_11, %c0_12] : memref<8x128xf32, #tpu.memory_space<vmem>>, vector<8x128xf32>
    tpu.vector_store %arg6[%c0_11, %c0_12], %16 {strides = array<i32>} : memref<8x128xf32, #tpu.memory_space<vmem>>, vector<8x128xf32>,
    return
  }
  func.func @transform_0(%arg0: i32) -> (i32, i32) {
    %c0_i32 = arith.constant 0 : i32
    %c0_i32_0 = arith.constant 0 : i32
    return %c0_i32, %arg0 : i32, i32
  }
  func.func @transform_1(%arg0: i32) -> (i32, i32) {
    %c0_i32 = arith.constant 0 : i32
    %c0_i32_0 = arith.constant 0 : i32
    %c0_i32_1 = arith.constant 0 : i32
    return %c0_i32, %c0_i32_0 : i32, i32
  }
  func.func @transform_2(%arg0: i32) -> (i32, i32) {
    %c0_i32 = arith.constant 0 : i32
    %c0_i32_0 = arith.constant 0 : i32
    %c0_i32_1 = arith.constant 0 : i32
    return %c0_i32, %c0_i32_0 : i32, i32
  }
  func.func @transform_3(%arg0: i32) -> (i32, i32) {
    %c0_i32 = arith.constant 0 : i32
    %c0_i32_0 = arith.constant 0 : i32
    %c0_i32_1 = arith.constant 0 : i32
    return %c0_i32, %c0_i32_0 : i32, i32
  }
  func.func @transform_4(%arg0: i32) -> (i32, i32) {
    %c0_i32 = arith.constant 0 : i32
    %c0_i32_0 = arith.constant 0 : i32
    %c0_i32_1 = arith.constant 0 : i32
    return %c0_i32, %c0_i32_0 : i32, i32
  }
  func.func @transform_5(%arg0: i32) -> (i32, i32) {
    %c0_i32 = arith.constant 0 : i32
    %c0_i32_0 = arith.constant 0 : i32
    return %c0_i32, %arg0 : i32, i32
  }
}

</mosaic_0001>

<llo_original>
// kernel: tpu_custom_call.1
$region0: #{tpu_custom_call.1}
  #allocation0 [shape = 'u32[]', space=smem, size = 0x4, offset = 0x4, fixed_abs, tag = 'smem constant byte address 0x4 - core index']
  #allocation1 [shape = 'u32[144,128]{1,0:T(1,128)}', space=vmem, size = 0x12000, scoped, tag = 'internal scratch']
  %s0 = inlined_call_operand.hbm [shape: f32[32,128], index: 0, kind: input, shape index: {}]
  %s1 = inlined_call_operand.vmem [shape: f32[16,32], index: 1, kind: input, shape index: {}]
  %s2 = inlined_call_operand.vmem [shape: f32[16,1], index: 2, kind: input, shape index: {}]
  %s3 = inlined_call_operand.vmem [shape: f32[8,16], index: 3, kind: input, shape index: {}]
  %s4 = inlined_call_operand.vmem [shape: f32[8,1], index: 4, kind: input, shape index: {}]
  %s5 = inlined_call_operand.hbm [shape: f32[8,128], index: 5, kind: output, shape index: {}]
  %s6 = sld [smem:[#allocation0]]
  $region34: #{tpu_custom_call.1} parent=0
    _
  %s8 = ssub.s32 1, %s6
  %s9 = scalar_select 0, %s8, %s6
  $region1: #{tpu_custom_call.1} parent=0
    #allocation2 [shape = 'u8[16384]{0}', space=vmem, size = 0x4000, scoped, tag = 'input window, operand 0, single buffered']
    #allocation3 [shape = 's32[1]{0}', space=sflag, size = 0x4, scoped, tag = 'scoped memory for tpu_custom_call.1']
    #allocation4 [shape = 's32[1]{0}', space=sflag, size = 0x4, scoped, tag = 'scoped memory for tpu_custom_call.1']
    #allocation5 [shape = 'u8[4096]{0}', space=vmem, size = 0x1000, scoped, tag = 'output window, operand 0, single buffered']
    %10 = vsyncpa [#allocation3], 0
    %11 = vsyncpa [#allocation4], 0
    // Predicated region
    $region2: #{tpu_custom_call.1} parent=1 // pred_check
      _
    $region3: #{tpu_custom_call.1} parent=1 // pred_check_branch
      %13 = sbr.rel (0) target = $region5
    $region4: #{tpu_custom_call.1} parent=1 // pred_region
      %s15 = ssub.s32 512, 512
      %16 = vsyncadd [#allocation3], %s15
      %s17 = sshll.u32 [#allocation2], 4
      %s18 = int_to_ptr.vmem [resolvable:$true] %s17
      %23 = dma.hbm_to_vmem [thread:$0]  %s0, 512, %s18, [#allocation3], 128, 128, 8
    $region5: #{tpu_custom_call.1} parent=1 // pred_fallthru
      _
    // Predicated region
    $region6: #{tpu_custom_call.1} parent=1 // pred_check
      _
    $region7: #{tpu_custom_call.1} parent=1 // pred_check_branch
      %25 = sbr.rel (0) target = $region9
    $region8: #{tpu_custom_call.1} parent=1 // pred_region
      _
    $region9: #{tpu_custom_call.1} parent=1 // pred_fallthru
      _
    // Predicated region
    $region10: #{tpu_custom_call.1} parent=1 // pred_check
      _
    $region11: #{tpu_custom_call.1} parent=1 // pred_check_branch
      %27 = sbr.rel (0) target = $region13
    $region12: #{tpu_custom_call.1} parent=1 // pred_region
      _
    $region13: #{tpu_custom_call.1} parent=1 // pred_fallthru
      _
    // Predicated region
    $region14: #{tpu_custom_call.1} parent=1 // pred_check
      _
    $region15: #{tpu_custom_call.1} parent=1 // pred_check_branch
      %29 = sbr.rel (0) target = $region17
    $region16: #{tpu_custom_call.1} parent=1 // pred_region
      _
    $region17: #{tpu_custom_call.1} parent=1 // pred_fallthru
      _
    // Predicated region
    $region18: #{tpu_custom_call.1} parent=1 // pred_check
      _
    $region19: #{tpu_custom_call.1} parent=1 // pred_check_branch
      %31 = sbr.rel (0) target = $region21
    $region20: #{tpu_custom_call.1} parent=1 // pred_region
      _
    $region21: #{tpu_custom_call.1} parent=1 // pred_fallthru
      _
    // Predicated region
    $region22: #{tpu_custom_call.1} parent=1 // pred_check
      _
    $region23: #{tpu_custom_call.1} parent=1 // pred_check_branch
      %33 = sbr.rel (0) target = $region25
    $region24: #{tpu_custom_call.1} parent=1 // pred_region
      %34 = dma.done [#allocation3], 512
    $region25: #{tpu_custom_call.1} parent=1 // pred_fallthru
      _
    %v36 = vld [vmem:[#allocation2] sm:$0xff]
    %v37 = vld [vmem:[#allocation2 + $0x8] sm:$0xff]
    %v38 = vld [vmem:[#allocation2 + $0x10] sm:$0xff]
    %v39 = vld [vmem:[#allocation2 + $0x18] sm:$0xff]
    %v40 = vpack.c.bf16 %v37, %v36
    %v41 = vpack.c.bf16 %v39, %v38
    %v42 = vld [vmem:[%s1] sm:$0xff]
    %v43 = vld [vmem:[%s1 + $0x8] sm:$0xff]
    %v44 = vpack.c.bf16 %v43, %v42
    %v45 = vld [vmem:[%s2] sm:$0xff]
    %v46 = vld [vmem:[%s2 + $0x8] sm:$0xff]
    %48 = vset.pattern.permute.xlu0 0
    %49 = vperm.xlu0 %48, %v45
    %v50 = vpop.permute.xlu0 %49
    %53 = vset.pattern.permute.xlu0 0
    %54 = vperm.xlu0 %53, %v46
    %v55 = vpop.permute.xlu0 %54
    %vm57 = vcmask 261120
    %v59 = vsel %vm57, %v44, 0
    %61 = vmatprep.subr.bf16.mxu0 0
    %62 = vmatpush1.bf16.msra.mxu0 %v40
    %63 = vmatprep.subr.bf16.mxu0 0
    %64 = vmatpush1.bf16.msra.mxu0 %v41
    %65 = vmatprep.subr.bf16.mxu0 0
    %66 = vmatpush1.bf16.msra.mxu0 0
    %67 = vmatprep.subr.bf16.mxu0 0
    %68 = vmatpush1.bf16.msra.mxu0 0
    %69 = vmatprep.subr.bf16.mxu0 0
    %70 = vmatpush1.bf16.msra.mxu0 0
    %71 = vmatprep.subr.bf16.mxu0 0
    %72 = vmatpush1.bf16.msra.mxu0 0
    %73 = vmatprep.subr.bf16.mxu0 0
    %74 = vmatpush1.bf16.msra.mxu0 0
    %75 = vmatprep.subr.bf16.mxu0 0
    %76 = vmatpush1.bf16.msra.mxu0 0
    %77 = vmatprep.subr.bf16.mxu0 0
    %78 = vmatpush1.bf16.msra.mxu0 0
    %79 = vmatprep.subr.bf16.mxu0 0
    %80 = vmatpush1.bf16.msra.mxu0 0
    %81 = vmatprep.subr.bf16.mxu0 0
    %82 = vmatpush1.bf16.msra.mxu0 0
    %83 = vmatprep.subr.bf16.mxu0 0
    %84 = vmatpush1.bf16.msra.mxu0 0
    %85 = vmatprep.subr.bf16.mxu0 0
    %86 = vmatpush1.bf16.msra.mxu0 0
    %87 = vmatprep.subr.bf16.mxu0 0
    %88 = vmatpush1.bf16.msra.mxu0 0
    %89 = vmatprep.subr.bf16.mxu0 0
    %90 = vmatpush1.bf16.msra.mxu0 0
    %91 = vmatprep.subr.bf16.mxu0 0
    %92 = vmatpush1.bf16.msra.mxu0 0
    %93 = vmatprep.mubr.bf16.mxu0 0
    %94 = vmatmul.mubr.bf16.gmra.mrb[0].mxu0 %v59
    %v95 = vpop.f32.mrb[0].mxu0
    %v96 = vadd.f32 %v50, %v95
    %v97 = vpop.f32.mrb[0].mxu0
    %v98 = vpop.f32.mrb[0].mxu0
    %v99 = vadd.f32 %v55, %v98
    %v100 = vpop.f32.mrb[0].mxu0
    %101 = vdwg.mxu0
    %v102 = vmax.f32 %v96, 0.0
    %v103 = vmax.f32 %v99, 0.0
    %v104 = vld [vmem:[%s3] sm:$0xff]
    %v105 = vpack.c.bf16 %v104, %v104
    %v106 = vpack.c.bf16 %v103, %v102
    %v107 = vld [vmem:[%s4] sm:$0xff]
    %109 = vset.pattern.permute.xlu0 0
    %110 = vperm.xlu0 %109, %v107
    %v111 = vpop.permute.xlu0 %110
    %vm113 = vcmask 130048
    %v115 = vsel %vm113, %v105, 0
    %117 = vmatprep.subr.bf16.mxu0 0
    %118 = vmatpush1.bf16.msra.mxu0 %v106
    %119 = vmatprep.subr.bf16.mxu0 0
    %120 = vmatpush1.bf16.msra.mxu0 0
    %121 = vmatprep.subr.bf16.mxu0 0
    %122 = vmatpush1.bf16.msra.mxu0 0
    %123 = vmatprep.subr.bf16.mxu0 0
    %124 = vmatpush1.bf16.msra.mxu0 0
    %125 = vmatprep.subr.bf16.mxu0 0
    %126 = vmatpush1.bf16.msra.mxu0 0
    %127 = vmatprep.subr.bf16.mxu0 0
    %128 = vmatpush1.bf16.msra.mxu0 0
    %129 = vmatprep.subr.bf16.mxu0 0
    %130 = vmatpush1.bf16.msra.mxu0 0
    %131 = vmatprep.subr.bf16.mxu0 0
    %132 = vmatpush1.bf16.msra.mxu0 0
    %133 = vmatprep.subr.bf16.mxu0 0
    %134 = vmatpush1.bf16.msra.mxu0 0
    %135 = vmatprep.subr.bf16.mxu0 0
    %136 = vmatpush1.bf16.msra.mxu0 0
    %137 = vmatprep.subr.bf16.mxu0 0
    %138 = vmatpush1.bf16.msra.mxu0 0
    %139 = vmatprep.subr.bf16.mxu0 0
    %140 = vmatpush1.bf16.msra.mxu0 0
    %141 = vmatprep.subr.bf16.mxu0 0
    %142 = vmatpush1.bf16.msra.mxu0 0
    %143 = vmatprep.subr.bf16.mxu0 0
    %144 = vmatpush1.bf16.msra.mxu0 0
    %145 = vmatprep.subr.bf16.mxu0 0
    %146 = vmatpush1.bf16.msra.mxu0 0
    %147 = vmatprep.subr.bf16.mxu0 0
    %148 = vmatpush1.bf16.msra.mxu0 0
    %149 = vmatprep.mubr.bf16.mxu0 0
    %150 = vmatmul.mubr.bf16.gmra.mrb[0].mxu0 %v115
    %v151 = vpop.f32.mrb[0].mxu0
    %v152 = vadd.f32 %v111, %v151
    %v153 = vpop.f32.mrb[0].mxu0
    %v154 = vpop.f32.mrb[0].mxu0
    %v155 = vpop.f32.mrb[0].mxu0
    %156 = vdwg.mxu0
    %157 = vst [vmem:[#allocation5] sm:$0xff] %v152
    // Predicated region
    $region26: #{tpu_custom_call.1} parent=1 // pred_check
      _
    $region27: #{tpu_custom_call.1} parent=1 // pred_check_branch
      %159 = sbr.rel (0) target = $region29
    $region28: #{tpu_custom_call.1} parent=1 // pred_region
      %s161 = ssub.s32 128, 128
      %162 = vsyncadd [#allocation4], %s161
      %s164 = sshll.u32 [#allocation5], 4
      %s165 = int_to_ptr.vmem [resolvable:$true] %s164
      %167 = dma.vmem_to_hbm [thread:$0]  %s165, 128, %s5, [#allocation4]
    $region29: #{tpu_custom_call.1} parent=1 // pred_fallthru
      _
    // Predicated region
    $region30: #{tpu_custom_call.1} parent=1 // pred_check
      _
    $region31: #{tpu_custom_call.1} parent=1 // pred_check_branch
      %169 = sbr.rel (0) target = $region33
    $region32: #{tpu_custom_call.1} parent=1 // pred_region
      %170 = dma.done [#allocation4], 128
    $region33: #{tpu_custom_call.1} parent=1 // pred_fallthru
      _
    %171 = vsyncpa [#allocation3], 1
    %172 = vsyncpa [#allocation4], 1

</llo_original>
